<compile_context>
chip_gen: v7x
topology: tpu7x:2x2x1
jax: 0.10.0
libtpu: 0.0.40
codegen_flags: <defaults>
</compile_context>

<pallas_src>
import functools

import jax
import jax.numpy as jnp
from jax.experimental import pallas as pl
from jax.experimental.pallas import tpu as pltpu

HIDDEN = 256
LANE = 128
SUBLANE = 16  # bf16 sublane packing; also a multiple of the f32 sublane (8)


def _round_up(x, m):
    return (x + m - 1) // m * m


def _num_tensorcores():
    """2 on v7x (2 TCs/chip), 1 on v5e/v6e. Only used to shape the grid for megacore."""
    try:
        kind = jax.devices()[0].device_kind.lower()
    except Exception:
        return 1
    return 2 if "v7" in kind else 1


def _choose_tiling(batch, tb, n_cores):
    """Pick batch tile TB and padded batch size.

    TB is always a multiple of 16 (bf16 (16,128) tiling). On a 2-TC chip the number
    of grid steps is rounded up to a multiple of the core count so both TensorCores
    get work under dimension_semantics=("parallel",).
    """
    tb = _round_up(max(tb, SUBLANE), SUBLANE)          # tolerate unaligned caller tb
    TB = min(tb, _round_up(batch, SUBLANE))
    steps = pl.cdiv(_round_up(batch, SUBLANE), TB)
    if n_cores > 1 and batch >= SUBLANE * n_cores:
        steps = _round_up(max(steps, n_cores), n_cores)
        TB = _round_up(pl.cdiv(batch, steps), SUBLANE)
    return TB, steps * TB


def dqn_kernel(x_ref, w_ref, b_ref, o_ref, *, in_pad, out_pad):
    """One batch tile: (TB, in_pad) -> (TB, out_pad). Weights resident across the grid."""
    H = HIDDEN
    cd = w_ref.dtype  # MXU operand dtype (bf16 by default)

    # Static slices of the packed weight / bias slabs (zero runtime cost; offsets are
    # multiples of 128 rows, i.e. tile-aligned for both bf16 and f32 layouts).
    w1 = w_ref[0:in_pad, 0:H]                            # (in_pad, H)
    w2 = w_ref[in_pad:in_pad + H, 0:H]                   # (H, H)
    w3 = w_ref[in_pad + H:in_pad + 2 * H, 0:out_pad]     # (H, out_pad)
    b1 = b_ref[0:1, 0:H]                                 # (1, H)  f32
    b2 = b_ref[1:2, 0:H]
    b3 = b_ref[2:3, 0:out_pad]

    x = x_ref[...]                                       # already compute dtype
    h1 = jnp.dot(x, w1, preferred_element_type=jnp.float32) + b1
    h1 = jnp.maximum(h1, 0.0)                            # relu(fc1), f32 on the VPU
    h2 = jnp.dot(h1.astype(cd), w2, preferred_element_type=jnp.float32) + b2
    h2 = jnp.maximum(h2, 0.0)                            # relu(fc2)
    out = jnp.dot(h2.astype(cd), w3, preferred_element_type=jnp.float32) + b3
    o_ref[...] = out.astype(o_ref.dtype)


def pack_params(params, input_size, output_size, compute_dtype=jnp.bfloat16):
    """Pack (w1,b1,w2,b2,w3,b3) into one lane-aligned weight slab + one bias slab.

    Call this ONCE per parameter update (not per forward) and reuse the slabs.
    Weight slab (compute_dtype): rows [0:in_pad)=w1, [in_pad:in_pad+H)=w2,
    [in_pad+H:in_pad+2H)=w3. Bias slab (f32, 8 rows for sublane alignment):
    row0=b1, row1=b2, row2=b3. Padded regions are zero, so padded input lanes /
    output lanes contribute nothing.
    """
    w1, b1, w2, b2, w3, b3 = params
    H = HIDDEN
    in_pad = _round_up(max(input_size, 1), LANE)
    out_pad = _round_up(max(output_size, 1), LANE)
    wp = max(H, out_pad)

    W = jnp.zeros((in_pad + 2 * H, wp), jnp.float32)
    W = W.at[:input_size, :H].set(w1)
    W = W.at[in_pad:in_pad + H, :H].set(w2)
    W = W.at[in_pad + H:in_pad + 2 * H, :output_size].set(w3)

    Bv = jnp.zeros((8, wp), jnp.float32)
    Bv = Bv.at[0, :H].set(b1[0])
    Bv = Bv.at[1, :H].set(b2[0])
    Bv = Bv.at[2, :output_size].set(b3[0])

    return W.astype(compute_dtype), Bv


@functools.partial(jax.jit, static_argnames=("input_size", "output_size", "tb", "n_cores"))
def dqn_forward_packed(x, W, Bv, *, input_size, output_size, tb=1024, n_cores=1):
    """Hot-path DQN forward on pre-packed slabs. tb: batch tile (sweep 1024-4096 for
    training batches; per-grid-step overhead, not MXU time, is the bottleneck)."""
    B = x.shape[0]
    H = HIDDEN
    in_pad = W.shape[0] - 2 * H
    out_pad = _round_up(max(output_size, 1), LANE)
    compute_dtype = W.dtype

    TB, B_pad = _choose_tiling(B, tb, n_cores)

    # x = x.float() from the PyTorch forward, then one cast to the MXU operand dtype.
    # Batch + feature lanes zero-padded so every block is (16,128)-aligned and every
    # store is lane-dense (unmasked vst). bf16 halves the input-side DMA bytes.
    x_pad = jnp.zeros((B_pad, in_pad), compute_dtype).at[:B, :input_size].set(
        x.astype(jnp.float32).astype(compute_dtype))

    kernel = functools.partial(dqn_kernel, in_pad=in_pad, out_pad=out_pad)

    # Advisory cost estimate so XLA can overlap this sub-microsecond call.
    cost = pl.CostEstimate(
        flops=2 * B_pad * (in_pad * H + H * H + H * out_pad),
        transcendentals=0,
        bytes_accessed=(x_pad.size * x_pad.dtype.itemsize
                        + W.size * W.dtype.itemsize
                        + Bv.size * Bv.dtype.itemsize
                        + B_pad * out_pad * 4),
    )

    # Double-buffered x/out tiles + weights; only set an explicit VMEM limit when a
    # very large TB would approach v5e's 16 MiB scoped-VMEM default.
    vmem_bytes = (2 * (TB * in_pad * x_pad.dtype.itemsize + TB * out_pad * 4)
                  + 2 * (W.size * W.dtype.itemsize + Bv.size * Bv.dtype.itemsize))
    vmem_limit = (min(int(vmem_bytes * 1.5), 40 * 1024 * 1024)
                  if vmem_bytes > 12 * 1024 * 1024 else None)

    out = pl.pallas_call(
        kernel,
        out_shape=jax.ShapeDtypeStruct((B_pad, out_pad), jnp.float32),
        grid=(B_pad // TB,),
        in_specs=[
            pl.BlockSpec((TB, in_pad), lambda i: (i, 0)),   # batch-tiled activations
            pl.BlockSpec(W.shape, lambda i: (0, 0)),        # weights: VMEM-resident
            pl.BlockSpec(Bv.shape, lambda i: (0, 0)),       # biases: VMEM-resident
        ],
        out_specs=pl.BlockSpec((TB, out_pad), lambda i: (i, 0)),
        compiler_params=pltpu.CompilerParams(
            dimension_semantics=("parallel",),              # split batch across TCs (v7x)
            vmem_limit_bytes=vmem_limit,
        ),
        cost_estimate=cost,
    )(x_pad, W, Bv)

    return out[:B, :output_size]


def dqn_forward(x, params, *, tb=1024, compute_dtype=jnp.bfloat16):
    """One-off convenience wrapper (packs every call). In a DQN action-selection /
    training loop, call pack_params once and reuse dqn_forward_packed directly."""
    input_size = params[0].shape[0]
    output_size = params[4].shape[1]
    W, Bv = pack_params(params, input_size, output_size, compute_dtype)
    return dqn_forward_packed(x, W, Bv, input_size=input_size, output_size=output_size,
                              tb=tb, n_cores=_num_tensorcores())


def init_dqn_params(key, input_size, output_size):
    """Deterministic init mimicking torch.nn.Linear default: U(-1/sqrt(fan_in), +1/sqrt(fan_in))."""
    def linear(key, fan_in, fan_out):
        kw, kb = jax.random.split(key)
        bound = 1.0 / jnp.sqrt(jnp.float32(fan_in))
        w = jax.random.uniform(kw, (fan_in, fan_out), jnp.float32, -bound, bound)
        b = jax.random.uniform(kb, (1, fan_out), jnp.float32, -bound, bound)
        return w, b

    k1, k2, k3 = jax.random.split(key, 3)
    w1, b1 = linear(k1, input_size, HIDDEN)
    w2, b2 = linear(k2, HIDDEN, HIDDEN)
    w3, b3 = linear(k3, HIDDEN, output_size)
    return (w1, b1, w2, b2, w3, b3)


def dqn_reference(x, params, compute_dtype=jnp.float32):
    """Pure-JAX reference; compute_dtype mirrors the kernel's MXU operand dtype."""
    w1, b1, w2, b2, w3, b3 = params
    c = lambda a: a.astype(compute_dtype)
    xf = x.astype(jnp.float32)
    h1 = jnp.maximum(jnp.dot(c(xf), c(w1), preferred_element_type=jnp.float32) + b1, 0.0)
    h2 = jnp.maximum(jnp.dot(c(h1), c(w2), preferred_element_type=jnp.float32) + b2, 0.0)
    return jnp.dot(c(h2), c(w3), preferred_element_type=jnp.float32) + b3


if __name__ == "__main__":
    key = jax.random.PRNGKey(0)
    k_params, k_x1, k_x2 = jax.random.split(key, 3)

    input_size = 16   # flattened observation
    output_size = 4   # number of discrete actions
    params = init_dqn_params(k_params, input_size, output_size)

    # Pack once (hoisted out of the per-call path) and reuse the slabs.
    W, Bv = pack_params(params, input_size, output_size)
    n_cores = _num_tensorcores()
    fwd = functools.partial(dqn_forward_packed, input_size=input_size,
                            output_size=output_size, n_cores=n_cores)

    # Small batch (single grid step on v5e/v6e).
    x_small = jax.random.normal(k_x1, (8, input_size), dtype=jnp.float32)
    out_small = jax.block_until_ready(fwd(x_small, W, Bv))
    assert out_small.shape == (8, output_size)
    assert jnp.allclose(out_small, dqn_reference(x_small, params, jnp.bfloat16),
                        atol=2e-3, rtol=2e-3)
    assert jnp.allclose(out_small, dqn_reference(x_small, params, jnp.float32),
                        atol=3e-2, rtol=3e-2)

    # Larger batch with a small tile to exercise a multi-step batch grid.
    x_big = jax.random.normal(k_x2, (384, input_size), dtype=jnp.float32)
    out_big = jax.block_until_ready(fwd(x_big, W, Bv, tb=128))
    assert out_big.shape == (384, output_size)
    assert jnp.allclose(out_big, dqn_reference(x_big, params, jnp.bfloat16),
                        atol=2e-3, rtol=2e-3)
    assert jnp.allclose(out_big, dqn_reference(x_big, params, jnp.float32),
                        atol=3e-2, rtol=3e-2)

    # Convenience (pack-per-call) wrapper still works and matches.
    out_conv = jax.block_until_ready(dqn_forward(x_small, params))
    assert jnp.allclose(out_conv, out_small, atol=1e-6, rtol=1e-6)

    print("KERNEL_OK")
</pallas_src>

<mosaic_0001>
module attributes {stable_mosaic.version = 11 : i64} {
  func.func @dqn_kernel(%arg0: i32, %arg1: memref<16x128xbf16, #tpu.memory_space<vmem>>, %arg2: memref<640x256xbf16, #tpu.memory_space<vmem>>, %arg3: memref<8x256xf32, #tpu.memory_space<vmem>>, %arg4: memref<16x128xf32, #tpu.memory_space<vmem>>) attributes {dimension_semantics = [#tpu.dimension_semantics<parallel>], iteration_bounds = array<i64: 1>, scalar_prefetch = 0 : i64, scratch_operands = 0 : i64, tpu.core_type = #tpu.core_type<tc>, window_params = [{transform_indices = @transform_0, window_bounds = array<i64: 16, 128>}, {pipeline_mode = #tpu.pipeline_mode<synchronous>, transform_indices = @transform_1, window_bounds = array<i64: 640, 256>}, {pipeline_mode = #tpu.pipeline_mode<synchronous>, transform_indices = @transform_2, window_bounds = array<i64: 8, 256>}, {transform_indices = @transform_3, window_bounds = array<i64: 16, 128>}]} {
    %c0 = arith.constant 0 : index
    %c0_0 = arith.constant 0 : index
    %0 = vector.load %arg2[%c0, %c0_0] : memref<640x256xbf16, #tpu.memory_space<vmem>>, vector<128x256xbf16>
    %c128 = arith.constant 128 : index
    %c0_1 = arith.constant 0 : index
    %1 = vector.load %arg2[%c128, %c0_1] : memref<640x256xbf16, #tpu.memory_space<vmem>>, vector<256x256xbf16>
    %c384 = arith.constant 384 : index
    %c0_2 = arith.constant 0 : index
    %2 = vector.load %arg2[%c384, %c0_2] : memref<640x256xbf16, #tpu.memory_space<vmem>>, vector<256x128xbf16>
    %c0_3 = arith.constant 0 : index
    %c0_4 = arith.constant 0 : index
    %3 = vector.load %arg3[%c0_3, %c0_4] : memref<8x256xf32, #tpu.memory_space<vmem>>, vector<1x256xf32>
    %c1 = arith.constant 1 : index
    %c0_5 = arith.constant 0 : index
    %4 = vector.load %arg3[%c1, %c0_5] : memref<8x256xf32, #tpu.memory_space<vmem>>, vector<1x256xf32>
    %c2 = arith.constant 2 : index
    %c0_6 = arith.constant 0 : index
    %5 = vector.load %arg3[%c2, %c0_6] : memref<8x256xf32, #tpu.memory_space<vmem>>, vector<1x128xf32>
    %c0_7 = arith.constant 0 : index
    %c0_8 = arith.constant 0 : index
    %6 = vector.load %arg1[%c0_7, %c0_8] : memref<16x128xbf16, #tpu.memory_space<vmem>>, vector<16x128xbf16>
    %cst = arith.constant dense<0.000000e+00> : vector<16x256xf32>
    %7 = tpu.matmul %6, %0, %cst {dimension_numbers = #tpu.dot_dimension_numbers<[1], [0], [0], [1], [0, 0, 1, 1], [], []>} : vector<16x128xbf16>, vector<128x256xbf16>, vector<16x256xf32> -> vector<16x256xf32>
    %8 = vector.broadcast %3 : vector<1x256xf32> to vector<16x256xf32>
    %9 = arith.addf %7, %8 : vector<16x256xf32>
    %cst_9 = arith.constant 0.000000e+00 : f32
    %10 = vector.broadcast %cst_9 : f32 to vector<16x256xf32>
    %11 = arith.maximumf %9, %10 : vector<16x256xf32>
    %12 = arith.truncf %11 : vector<16x256xf32> to vector<16x256xbf16>
    %cst_10 = arith.constant dense<0.000000e+00> : vector<16x256xf32>
    %13 = tpu.matmul %12, %1, %cst_10 {dimension_numbers = #tpu.dot_dimension_numbers<[1], [0], [0], [1], [0, 0, 1, 1], [], []>} : vector<16x256xbf16>, vector<256x256xbf16>, vector<16x256xf32> -> vector<16x256xf32>
    %14 = vector.broadcast %4 : vector<1x256xf32> to vector<16x256xf32>
    %15 = arith.addf %13, %14 : vector<16x256xf32>
    %cst_11 = arith.constant 0.000000e+00 : f32
    %16 = vector.broadcast %cst_11 : f32 to vector<16x256xf32>
    %17 = arith.maximumf %15, %16 : vector<16x256xf32>
    %18 = arith.truncf %17 : vector<16x256xf32> to vector<16x256xbf16>
    %cst_12 = arith.constant dense<0.000000e+00> : vector<16x128xf32>
    %19 = tpu.matmul %18, %2, %cst_12 {dimension_numbers = #tpu.dot_dimension_numbers<[1], [0], [0], [1], [0, 0, 1, 1], [], []>} : vector<16x256xbf16>, vector<256x128xbf16>, vector<16x128xf32> -> vector<16x128xf32>
    %20 = vector.broadcast %5 : vector<1x128xf32> to vector<16x128xf32>
    %21 = arith.addf %19, %20 : vector<16x128xf32>
    %c0_13 = arith.constant 0 : index
    %c0_14 = arith.constant 0 : index
    %22 = vector.load %arg4[%c0_13, %c0_14] : memref<16x128xf32, #tpu.memory_space<vmem>>, vector<16x128xf32>
    tpu.vector_store %arg4[%c0_13, %c0_14], %21 {strides = array<i32>} : memref<16x128xf32, #tpu.memory_space<vmem>>, vector<16x128xf32>,
    return
  }
  func.func @transform_0(%arg0: i32) -> (i32, i32) {
    %c0_i32 = arith.constant 0 : i32
    %c0_i32_0 = arith.constant 0 : i32
    return %arg0, %c0_i32 : i32, i32
  }
  func.func @transform_1(%arg0: i32) -> (i32, i32) {
    %c0_i32 = arith.constant 0 : i32
    %c0_i32_0 = arith.constant 0 : i32
    %c0_i32_1 = arith.constant 0 : i32
    return %c0_i32, %c0_i32_0 : i32, i32
  }
  func.func @transform_2(%arg0: i32) -> (i32, i32) {
    %c0_i32 = arith.constant 0 : i32
    %c0_i32_0 = arith.constant 0 : i32
    %c0_i32_1 = arith.constant 0 : i32
    return %c0_i32, %c0_i32_0 : i32, i32
  }
  func.func @transform_3(%arg0: i32) -> (i32, i32) {
    %c0_i32 = arith.constant 0 : i32
    %c0_i32_0 = arith.constant 0 : i32
    return %arg0, %c0_i32 : i32, i32
  }
}

</mosaic_0001>

<llo_original>
// kernel: dqn_forward_packed.1
$region0: #{dqn_forward_packed.1}
  #allocation0 [shape = 'u32[]', space=smem, size = 0x4, offset = 0x4, fixed_abs, tag = 'smem constant byte address 0x4 - core index']
  #allocation1 [shape = 'u32[144,128]{1,0:T(1,128)}', space=vmem, size = 0x12000, scoped, tag = 'internal scratch']
  %s0 = inlined_call_operand.vmem [shape: bf16[16,128], index: 0, kind: input, shape index: {}]
  %s1 = inlined_call_operand.hbm [shape: bf16[640,256], index: 1, kind: input, shape index: {}]
  %s2 = inlined_call_operand.vmem [shape: f32[8,256], index: 2, kind: input, shape index: {}]
  %s3 = inlined_call_operand.vmem [shape: f32[16,128], index: 3, kind: output, shape index: {}]
  %s4 = sld [smem:[#allocation0]]
  $region26: #{dqn_forward_packed.1} parent=0
    _
  %s6 = ssub.s32 1, %s4
  %s7 = scalar_select 0, %s6, %s4
  $region1: #{dqn_forward_packed.1} parent=0
    #allocation2 [shape = 'u8[327680]{0}', space=vmem, size = 0x50000, scoped, tag = 'input window, operand 1, single buffered']
    #allocation3 [shape = 's32[1]{0}', space=sflag, size = 0x4, scoped, tag = 'scoped memory for dqn_forward_packed.1']
    %8 = vsyncpa [#allocation3], 0
    // Predicated region
    $region2: #{dqn_forward_packed.1} parent=1 // pred_check
      _
    $region3: #{dqn_forward_packed.1} parent=1 // pred_check_branch
      %10 = sbr.rel (0) target = $region5
    $region4: #{dqn_forward_packed.1} parent=1 // pred_region
      _
    $region5: #{dqn_forward_packed.1} parent=1 // pred_fallthru
      _
    // Predicated region
    $region6: #{dqn_forward_packed.1} parent=1 // pred_check
      _
    $region7: #{dqn_forward_packed.1} parent=1 // pred_check_branch
      %12 = sbr.rel (0) target = $region9
    $region8: #{dqn_forward_packed.1} parent=1 // pred_region
      %s14 = ssub.s32 10240, 10240
      %15 = vsyncadd [#allocation3], %s14
      %s16 = sshll.u32 [#allocation2], 4
      %s17 = int_to_ptr.vmem [resolvable:$true] %s16
      %22 = dma.hbm_to_vmem [thread:$0]  %s1, 10240, %s17, [#allocation3], 128, 128, 8
    $region9: #{dqn_forward_packed.1} parent=1 // pred_fallthru
      _
    // Predicated region
    $region10: #{dqn_forward_packed.1} parent=1 // pred_check
      _
    $region11: #{dqn_forward_packed.1} parent=1 // pred_check_branch
      %24 = sbr.rel (0) target = $region13
    $region12: #{dqn_forward_packed.1} parent=1 // pred_region
      _
    $region13: #{dqn_forward_packed.1} parent=1 // pred_fallthru
      _
    // Predicated region
    $region14: #{dqn_forward_packed.1} parent=1 // pred_check
      _
    $region15: #{dqn_forward_packed.1} parent=1 // pred_check_branch
      %26 = sbr.rel (0) target = $region17
    $region16: #{dqn_forward_packed.1} parent=1 // pred_region
      %27 = dma.done [#allocation3], 10240
    $region17: #{dqn_forward_packed.1} parent=1 // pred_fallthru
      _
    %v29 = vld [vmem:[#allocation2] sm:$0xff]
    %v30 = vld [vmem:[#allocation2 + $0x8] sm:$0xff]
    %v31 = vld [vmem:[#allocation2 + $0x10] sm:$0xff]
    %v32 = vld [vmem:[#allocation2 + $0x18] sm:$0xff]
    %v33 = vld [vmem:[#allocation2 + $0x20] sm:$0xff]
    %v34 = vld [vmem:[#allocation2 + $0x28] sm:$0xff]
    %v35 = vld [vmem:[#allocation2 + $0x30] sm:$0xff]
    %v36 = vld [vmem:[#allocation2 + $0x38] sm:$0xff]
    %v37 = vld [vmem:[#allocation2 + $0x40] sm:$0xff]
    %v38 = vld [vmem:[#allocation2 + $0x48] sm:$0xff]
    %v39 = vld [vmem:[#allocation2 + $0x50] sm:$0xff]
    %v40 = vld [vmem:[#allocation2 + $0x58] sm:$0xff]
    %v41 = vld [vmem:[#allocation2 + $0x60] sm:$0xff]
    %v42 = vld [vmem:[#allocation2 + $0x68] sm:$0xff]
    %v43 = vld [vmem:[#allocation2 + $0x70] sm:$0xff]
    %v44 = vld [vmem:[#allocation2 + $0x78] sm:$0xff]
    %v45 = vld [vmem:[#allocation2 + $0x80] sm:$0xff]
    %v46 = vld [vmem:[#allocation2 + $0x88] sm:$0xff]
    %v47 = vld [vmem:[#allocation2 + $0x90] sm:$0xff]
    %v48 = vld [vmem:[#allocation2 + $0x98] sm:$0xff]
    %v49 = vld [vmem:[#allocation2 + $0xa0] sm:$0xff]
    %v50 = vld [vmem:[#allocation2 + $0xa8] sm:$0xff]
    %v51 = vld [vmem:[#allocation2 + $0xb0] sm:$0xff]
    %v52 = vld [vmem:[#allocation2 + $0xb8] sm:$0xff]
    %v53 = vld [vmem:[#allocation2 + $0xc0] sm:$0xff]
    %v54 = vld [vmem:[#allocation2 + $0xc8] sm:$0xff]
    %v55 = vld [vmem:[#allocation2 + $0xd0] sm:$0xff]
    %v56 = vld [vmem:[#allocation2 + $0xd8] sm:$0xff]
    %v57 = vld [vmem:[#allocation2 + $0xe0] sm:$0xff]
    %v58 = vld [vmem:[#allocation2 + $0xe8] sm:$0xff]
    %v59 = vld [vmem:[#allocation2 + $0xf0] sm:$0xff]
    %v60 = vld [vmem:[#allocation2 + $0xf8] sm:$0xff]
    %v61 = vld [vmem:[#allocation2 + $0x100] sm:$0xff]
    %v62 = vld [vmem:[#allocation2 + $0x108] sm:$0xff]
    %v63 = vld [vmem:[#allocation2 + $0x110] sm:$0xff]
    %v64 = vld [vmem:[#allocation2 + $0x118] sm:$0xff]
    %v65 = vld [vmem:[#allocation2 + $0x120] sm:$0xff]
    %v66 = vld [vmem:[#allocation2 + $0x128] sm:$0xff]
    %v67 = vld [vmem:[#allocation2 + $0x130] sm:$0xff]
    %v68 = vld [vmem:[#allocation2 + $0x138] sm:$0xff]
    %v69 = vld [vmem:[#allocation2 + $0x140] sm:$0xff]
    %v70 = vld [vmem:[#allocation2 + $0x148] sm:$0xff]
    %v71 = vld [vmem:[#allocation2 + $0x150] sm:$0xff]
    %v72 = vld [vmem:[#allocation2 + $0x158] sm:$0xff]
    %v73 = vld [vmem:[#allocation2 + $0x160] sm:$0xff]
    %v74 = vld [vmem:[#allocation2 + $0x168] sm:$0xff]
    %v75 = vld [vmem:[#allocation2 + $0x170] sm:$0xff]
    %v76 = vld [vmem:[#allocation2 + $0x178] sm:$0xff]
    %v77 = vld [vmem:[#allocation2 + $0x180] sm:$0xf]
    %v78 = vld [vmem:[#allocation2 + $0x188] sm:$0xf]
    %v79 = vld [vmem:[#allocation2 + $0x190] sm:$0xf]
    %v80 = vld [vmem:[#allocation2 + $0x198] sm:$0xf]
    %v81 = vld [vmem:[#allocation2 + $0x1a0] sm:$0xf]
    %v82 = vld [vmem:[#allocation2 + $0x1a8] sm:$0xf]
    %v83 = vld [vmem:[#allocation2 + $0x1b0] sm:$0xf]
    %v84 = vld [vmem:[#allocation2 + $0x1b8] sm:$0xf]
    %v85 = vld [vmem:[#allocation2 + $0x1c0] sm:$0xf]
    %v86 = vld [vmem:[#allocation2 + $0x1c8] sm:$0xf]
    %v87 = vld [vmem:[#allocation2 + $0x1d0] sm:$0xf]
    %v88 = vld [vmem:[#allocation2 + $0x1d8] sm:$0xf]
    %v89 = vld [vmem:[#allocation2 + $0x1e0] sm:$0xf]
    %v90 = vld [vmem:[#allocation2 + $0x1e8] sm:$0xf]
    %v91 = vld [vmem:[#allocation2 + $0x1f0] sm:$0xf]
    %v92 = vld [vmem:[#allocation2 + $0x1f8] sm:$0xf]
    %v93 = vld [vmem:[#allocation2 + $0x200] sm:$0xf]
    %v94 = vld [vmem:[#allocation2 + $0x208] sm:$0xf]
    %v95 = vld [vmem:[#allocation2 + $0x210] sm:$0xf]
    %v96 = vld [vmem:[#allocation2 + $0x218] sm:$0xf]
    %v97 = vld [vmem:[#allocation2 + $0x220] sm:$0xf]
    %v98 = vld [vmem:[#allocation2 + $0x228] sm:$0xf]
    %v99 = vld [vmem:[#allocation2 + $0x230] sm:$0xf]
    %v100 = vld [vmem:[#allocation2 + $0x238] sm:$0xf]
    %v101 = vld [vmem:[#allocation2 + $0x240] sm:$0xf]
    %v102 = vld [vmem:[#allocation2 + $0x248] sm:$0xf]
    %v103 = vld [vmem:[#allocation2 + $0x250] sm:$0xf]
    %v104 = vld [vmem:[#allocation2 + $0x258] sm:$0xf]
    %v105 = vld [vmem:[#allocation2 + $0x260] sm:$0xf]
    %v106 = vld [vmem:[#allocation2 + $0x268] sm:$0xf]
    %v107 = vld [vmem:[#allocation2 + $0x270] sm:$0xf]
    %v108 = vld [vmem:[#allocation2 + $0x278] sm:$0xf]
    %v109 = vld [vmem:[%s2] ss:$8 sm:$0x3]
    %s110 = scalar_lea.vmem %s2, 1
    %v111 = vld [vmem:[%s110] ss:$8 sm:$0x3]
    %v112 = vld [vmem:[%s2 + $0x2] ss:$0 sm:$0xff]
    %v113 = vld [vmem:[%s0] sm:$0xf]
    %v114 = vld [vmem:[%s0 + $0x4] sm:$0xf]
    %v116 = vlaneseq
    %v117 = vshrl.u32 %v116, 7
    %v118 = vsub.s32 0, %v117
    %v119 = vrot.slane %v109, %v118
    %v120 = vlaneseq
    %v121 = vshrl.u32 %v120, 7
    %v122 = vsub.s32 1, %v121
    %v123 = vrot.slane %v109, %v122
    %v128 = vunpack.c.l.b16 %v113
    %v129 = vunpack.c.l.b16 %v114
    %v130 = vpack.c.b16 %v129, %v128
    %v148 = vunpack.c.l.b16 %v29
    %v149 = vunpack.c.h.b16 %v29
    %v150 = vunpack.c.l.b16 %v30
    %v151 = vunpack.c.h.b16 %v30
    %v152 = vunpack.c.l.b16 %v31
    %v153 = vunpack.c.h.b16 %v31
    %v154 = vunpack.c.l.b16 %v32
    %v155 = vunpack.c.h.b16 %v32
    %v156 = vunpack.c.l.b16 %v33
    %v157 = vunpack.c.h.b16 %v33
    %v158 = vunpack.c.l.b16 %v34
    %v159 = vunpack.c.h.b16 %v34
    %v160 = vunpack.c.l.b16 %v35
    %v161 = vunpack.c.h.b16 %v35
    %v162 = vunpack.c.l.b16 %v36
    %v163 = vunpack.c.h.b16 %v36
    %v164 = vunpack.c.l.b16 %v37
    %v165 = vunpack.c.h.b16 %v37
    %v166 = vunpack.c.l.b16 %v38
    %v167 = vunpack.c.h.b16 %v38
    %v168 = vunpack.c.l.b16 %v39
    %v169 = vunpack.c.h.b16 %v39
    %v170 = vunpack.c.l.b16 %v40
    %v171 = vunpack.c.h.b16 %v40
    %v172 = vunpack.c.l.b16 %v41
    %v173 = vunpack.c.h.b16 %v41
    %v174 = vunpack.c.l.b16 %v42
    %v175 = vunpack.c.h.b16 %v42
    %v176 = vunpack.c.l.b16 %v43
    %v177 = vunpack.c.h.b16 %v43
    %v178 = vunpack.c.l.b16 %v44
    %v179 = vunpack.c.h.b16 %v44
    %v180 = vpack.c.b16 %v150, %v148
    %v181 = vpack.c.b16 %v151, %v149
    %v182 = vpack.c.b16 %v154, %v152
    %v183 = vpack.c.b16 %v155, %v153
    %v184 = vpack.c.b16 %v158, %v156
    %v185 = vpack.c.b16 %v159, %v157
    %v186 = vpack.c.b16 %v162, %v160
    %v187 = vpack.c.b16 %v163, %v161
    %v188 = vpack.c.b16 %v166, %v164
    %v189 = vpack.c.b16 %v167, %v165
    %v190 = vpack.c.b16 %v170, %v168
    %v191 = vpack.c.b16 %v171, %v169
    %v192 = vpack.c.b16 %v174, %v172
    %v193 = vpack.c.b16 %v175, %v173
    %v194 = vpack.c.b16 %v178, %v176
    %v195 = vpack.c.b16 %v179, %v177
    %212 = vmatprep.subr.bf16.mxu0 %v181
    %213 = vmatpush1.bf16.msra.mxu0 %v180
    %214 = vmatprep.subr.bf16.mxu0 %v183
    %215 = vmatpush1.bf16.msra.mxu0 %v182
    %216 = vmatprep.subr.bf16.mxu0 %v185
    %217 = vmatpush1.bf16.msra.mxu0 %v184
    %218 = vmatprep.subr.bf16.mxu0 %v187
    %219 = vmatpush1.bf16.msra.mxu0 %v186
    %220 = vmatprep.subr.bf16.mxu0 %v189
    %221 = vmatpush1.bf16.msra.mxu0 %v188
    %222 = vmatprep.subr.bf16.mxu0 %v191
    %223 = vmatpush1.bf16.msra.mxu0 %v190
    %224 = vmatprep.subr.bf16.mxu0 %v193
    %225 = vmatpush1.bf16.msra.mxu0 %v192
    %226 = vmatprep.subr.bf16.mxu0 %v195
    %227 = vmatpush1.bf16.msra.mxu0 %v194
    %228 = vmatprep.subr.bf16.mxu0 0
    %229 = vmatpush1.bf16.msra.mxu0 0
    %230 = vmatprep.subr.bf16.mxu0 0
    %231 = vmatpush1.bf16.msra.mxu0 0
    %232 = vmatprep.subr.bf16.mxu0 0
    %233 = vmatpush1.bf16.msra.mxu0 0
    %234 = vmatprep.subr.bf16.mxu0 0
    %235 = vmatpush1.bf16.msra.mxu0 0
    %236 = vmatprep.subr.bf16.mxu0 0
    %237 = vmatpush1.bf16.msra.mxu0 0
    %238 = vmatprep.subr.bf16.mxu0 0
    %239 = vmatpush1.bf16.msra.mxu0 0
    %240 = vmatprep.subr.bf16.mxu0 0
    %241 = vmatpush1.bf16.msra.mxu0 0
    %242 = vmatprep.subr.bf16.mxu0 0
    %243 = vmatpush1.bf16.msra.mxu0 0
    %244 = vmatprep.mubr.bf16.mxu0 0
    %245 = vmatmul.mubr.bf16.gmra.mrb[0].mxu0 %v130
    %v246 = vpop.f32.mrb[0].mxu0
    %v247 = vadd.f32 %v119, %v246
    %v248 = vpop.f32.mrb[0].mxu0
    %v249 = vadd.f32 %v123, %v248
    %v250 = vpop.f32.mrb[0].mxu0
    %v251 = vadd.f32 %v119, %v250
    %v252 = vpop.f32.mrb[0].mxu0
    %v253 = vadd.f32 %v123, %v252
    %254 = vdwg.mxu0
    %v255 = vmax.f32 %v247, 0.0
    %v256 = vmax.f32 %v249, 0.0
    %v257 = vmax.f32 %v251, 0.0
    %v258 = vmax.f32 %v253, 0.0
    %v259 = vpack.c.bf16 %v257, %v255
    %v260 = vpack.c.bf16 %v258, %v256
    %v262 = vlaneseq
    %v263 = vshrl.u32 %v262, 7
    %v264 = vsub.s32 0, %v263
    %v265 = vrot.slane %v111, %v264
    %v266 = vlaneseq
    %v267 = vshrl.u32 %v266, 7
    %v268 = vsub.s32 1, %v267
    %v269 = vrot.slane %v111, %v268
    %v304 = vunpack.c.l.b16 %v45
    %v305 = vunpack.c.h.b16 %v45
    %v306 = vunpack.c.l.b16 %v46
    %v307 = vunpack.c.h.b16 %v46
    %v308 = vunpack.c.l.b16 %v47
    %v309 = vunpack.c.h.b16 %v47
    %v310 = vunpack.c.l.b16 %v48
    %v311 = vunpack.c.h.b16 %v48
    %v312 = vunpack.c.l.b16 %v49
    %v313 = vunpack.c.h.b16 %v49
    %v314 = vunpack.c.l.b16 %v50
    %v315 = vunpack.c.h.b16 %v50
    %v316 = vunpack.c.l.b16 %v51
    %v317 = vunpack.c.h.b16 %v51
    %v318 = vunpack.c.l.b16 %v52
    %v319 = vunpack.c.h.b16 %v52
    %v320 = vunpack.c.l.b16 %v53
    %v321 = vunpack.c.h.b16 %v53
    %v322 = vunpack.c.l.b16 %v54
    %v323 = vunpack.c.h.b16 %v54
    %v324 = vunpack.c.l.b16 %v55
    %v325 = vunpack.c.h.b16 %v55
    %v326 = vunpack.c.l.b16 %v56
    %v327 = vunpack.c.h.b16 %v56
    %v328 = vunpack.c.l.b16 %v57
    %v329 = vunpack.c.h.b16 %v57
    %v330 = vunpack.c.l.b16 %v58
    %v331 = vunpack.c.h.b16 %v58
    %v332 = vunpack.c.l.b16 %v59
    %v333 = vunpack.c.h.b16 %v59
    %v334 = vunpack.c.l.b16 %v60
    %v335 = vunpack.c.h.b16 %v60
    %v336 = vunpack.c.l.b16 %v61
    %v337 = vunpack.c.h.b16 %v61
    %v338 = vunpack.c.l.b16 %v62
    %v339 = vunpack.c.h.b16 %v62
    %v340 = vunpack.c.l.b16 %v63
    %v341 = vunpack.c.h.b16 %v63
    %v342 = vunpack.c.l.b16 %v64
    %v343 = vunpack.c.h.b16 %v64
    %v344 = vunpack.c.l.b16 %v65
    %v345 = vunpack.c.h.b16 %v65
    %v346 = vunpack.c.l.b16 %v66
    %v347 = vunpack.c.h.b16 %v66
    %v348 = vunpack.c.l.b16 %v67
    %v349 = vunpack.c.h.b16 %v67
    %v350 = vunpack.c.l.b16 %v68
    %v351 = vunpack.c.h.b16 %v68
    %v352 = vunpack.c.l.b16 %v69
    %v353 = vunpack.c.h.b16 %v69
    %v354 = vunpack.c.l.b16 %v70
    %v355 = vunpack.c.h.b16 %v70
    %v356 = vunpack.c.l.b16 %v71
    %v357 = vunpack.c.h.b16 %v71
    %v358 = vunpack.c.l.b16 %v72
    %v359 = vunpack.c.h.b16 %v72
    %v360 = vunpack.c.l.b16 %v73
    %v361 = vunpack.c.h.b16 %v73
    %v362 = vunpack.c.l.b16 %v74
    %v363 = vunpack.c.h.b16 %v74
    %v364 = vunpack.c.l.b16 %v75
    %v365 = vunpack.c.h.b16 %v75
    %v366 = vunpack.c.l.b16 %v76
    %v367 = vunpack.c.h.b16 %v76
    %v368 = vpack.c.b16 %v306, %v304
    %v369 = vpack.c.b16 %v307, %v305
    %v370 = vpack.c.b16 %v310, %v308
    %v371 = vpack.c.b16 %v311, %v309
    %v372 = vpack.c.b16 %v314, %v312
    %v373 = vpack.c.b16 %v315, %v313
    %v374 = vpack.c.b16 %v318, %v316
    %v375 = vpack.c.b16 %v319, %v317
    %v376 = vpack.c.b16 %v322, %v320
    %v377 = vpack.c.b16 %v323, %v321
    %v378 = vpack.c.b16 %v326, %v324
    %v379 = vpack.c.b16 %v327, %v325
    %v380 = vpack.c.b16 %v330, %v328
    %v381 = vpack.c.b16 %v331, %v329
    %v382 = vpack.c.b16 %v334, %v332
    %v383 = vpack.c.b16 %v335, %v333
    %v384 = vpack.c.b16 %v338, %v336
    %v385 = vpack.c.b16 %v339, %v337
    %v386 = vpack.c.b16 %v342, %v340
    %v387 = vpack.c.b16 %v343, %v341
    %v388 = vpack.c.b16 %v346, %v344
    %v389 = vpack.c.b16 %v347, %v345
    %v390 = vpack.c.b16 %v350, %v348
    %v391 = vpack.c.b16 %v351, %v349
    %v392 = vpack.c.b16 %v354, %v352
    %v393 = vpack.c.b16 %v355, %v353
    %v394 = vpack.c.b16 %v358, %v356
    %v395 = vpack.c.b16 %v359, %v357
    %v396 = vpack.c.b16 %v362, %v360
    %v397 = vpack.c.b16 %v363, %v361
    %v398 = vpack.c.b16 %v366, %v364
    %v399 = vpack.c.b16 %v367, %v365
    %432 = vmatprep.subr.bf16.mxu0 %v369
    %433 = vmatpush1.bf16.msra.mxu0 %v368
    %434 = vmatprep.subr.bf16.mxu0 %v371
    %435 = vmatpush1.bf16.msra.mxu0 %v370
    %436 = vmatprep.subr.bf16.mxu0 %v373
    %437 = vmatpush1.bf16.msra.mxu0 %v372
    %438 = vmatprep.subr.bf16.mxu0 %v375
    %439 = vmatpush1.bf16.msra.mxu0 %v374
    %440 = vmatprep.subr.bf16.mxu0 %v377
    %441 = vmatpush1.bf16.msra.mxu0 %v376
    %442 = vmatprep.subr.bf16.mxu0 %v379
    %443 = vmatpush1.bf16.msra.mxu0 %v378
    %444 = vmatprep.subr.bf16.mxu0 %v381
    %445 = vmatpush1.bf16.msra.mxu0 %v380
    %446 = vmatprep.subr.bf16.mxu0 %v383
    %447 = vmatpush1.bf16.msra.mxu0 %v382
    %448 = vmatprep.subr.bf16.mxu0 %v385
    %449 = vmatpush1.bf16.msra.mxu0 %v384
    %450 = vmatprep.subr.bf16.mxu0 %v387
    %451 = vmatpush1.bf16.msra.mxu0 %v386
    %452 = vmatprep.subr.bf16.mxu0 %v389
    %453 = vmatpush1.bf16.msra.mxu0 %v388
    %454 = vmatprep.subr.bf16.mxu0 %v391
    %455 = vmatpush1.bf16.msra.mxu0 %v390
    %456 = vmatprep.subr.bf16.mxu0 %v393
    %457 = vmatpush1.bf16.msra.mxu0 %v392
    %458 = vmatprep.subr.bf16.mxu0 %v395
    %459 = vmatpush1.bf16.msra.mxu0 %v394
    %460 = vmatprep.subr.bf16.mxu0 %v397
    %461 = vmatpush1.bf16.msra.mxu0 %v396
    %462 = vmatprep.subr.bf16.mxu0 %v399
    %463 = vmatpush1.bf16.msra.mxu0 %v398
    %464 = vmatprep.mubr.bf16.mxu0 %v260
    %465 = vmatmul.mubr.bf16.gmra.mrb[0].mxu0 %v259
    %v466 = vpop.f32.mrb[0].mxu0
    %v467 = vadd.f32 %v265, %v466
    %v468 = vpop.f32.mrb[0].mxu0
    %v469 = vadd.f32 %v269, %v468
    %v470 = vpop.f32.mrb[0].mxu0
    %v471 = vadd.f32 %v265, %v470
    %v472 = vpop.f32.mrb[0].mxu0
    %v473 = vadd.f32 %v269, %v472
    %474 = vdwg.mxu0
    %v475 = vmax.f32 %v467, 0.0
    %v476 = vmax.f32 %v469, 0.0
    %v477 = vmax.f32 %v471, 0.0
    %v478 = vmax.f32 %v473, 0.0
    %v479 = vpack.c.bf16 %v477, %v475
    %v480 = vpack.c.bf16 %v478, %v476
    %v513 = vunpack.c.l.b16 %v77
    %v514 = vunpack.c.l.b16 %v78
    %v515 = vunpack.c.l.b16 %v79
    %v516 = vunpack.c.l.b16 %v80
    %v517 = vunpack.c.l.b16 %v81
    %v518 = vunpack.c.l.b16 %v82
    %v519 = vunpack.c.l.b16 %v83
    %v520 = vunpack.c.l.b16 %v84
    %v521 = vunpack.c.l.b16 %v85
    %v522 = vunpack.c.l.b16 %v86
    %v523 = vunpack.c.l.b16 %v87
    %v524 = vunpack.c.l.b16 %v88
    %v525 = vunpack.c.l.b16 %v89
    %v526 = vunpack.c.l.b16 %v90
    %v527 = vunpack.c.l.b16 %v91
    %v528 = vunpack.c.l.b16 %v92
    %v529 = vunpack.c.l.b16 %v93
    %v530 = vunpack.c.l.b16 %v94
    %v531 = vunpack.c.l.b16 %v95
    %v532 = vunpack.c.l.b16 %v96
    %v533 = vunpack.c.l.b16 %v97
    %v534 = vunpack.c.l.b16 %v98
    %v535 = vunpack.c.l.b16 %v99
    %v536 = vunpack.c.l.b16 %v100
    %v537 = vunpack.c.l.b16 %v101
    %v538 = vunpack.c.l.b16 %v102
    %v539 = vunpack.c.l.b16 %v103
    %v540 = vunpack.c.l.b16 %v104
    %v541 = vunpack.c.l.b16 %v105
    %v542 = vunpack.c.l.b16 %v106
    %v543 = vunpack.c.l.b16 %v107
    %v544 = vunpack.c.l.b16 %v108
    %v545 = vpack.c.b16 %v514, %v513
    %v546 = vpack.c.b16 %v516, %v515
    %v547 = vpack.c.b16 %v518, %v517
    %v548 = vpack.c.b16 %v520, %v519
    %v549 = vpack.c.b16 %v522, %v521
    %v550 = vpack.c.b16 %v524, %v523
    %v551 = vpack.c.b16 %v526, %v525
    %v552 = vpack.c.b16 %v528, %v527
    %v553 = vpack.c.b16 %v530, %v529
    %v554 = vpack.c.b16 %v532, %v531
    %v555 = vpack.c.b16 %v534, %v533
    %v556 = vpack.c.b16 %v536, %v535
    %v557 = vpack.c.b16 %v538, %v537
    %v558 = vpack.c.b16 %v540, %v539
    %v559 = vpack.c.b16 %v542, %v541
    %v560 = vpack.c.b16 %v544, %v543
    %577 = vmatprep.subr.bf16.mxu0 0
    %578 = vmatpush1.bf16.msra.mxu0 %v545
    %579 = vmatprep.subr.bf16.mxu0 0
    %580 = vmatpush1.bf16.msra.mxu0 %v546
    %581 = vmatprep.subr.bf16.mxu0 0
    %582 = vmatpush1.bf16.msra.mxu0 %v547
    %583 = vmatprep.subr.bf16.mxu0 0
    %584 = vmatpush1.bf16.msra.mxu0 %v548
    %585 = vmatprep.subr.bf16.mxu0 0
    %586 = vmatpush1.bf16.msra.mxu0 %v549
    %587 = vmatprep.subr.bf16.mxu0 0
    %588 = vmatpush1.bf16.msra.mxu0 %v550
    %589 = vmatprep.subr.bf16.mxu0 0
    %590 = vmatpush1.bf16.msra.mxu0 %v551
    %591 = vmatprep.subr.bf16.mxu0 0
    %592 = vmatpush1.bf16.msra.mxu0 %v552
    %593 = vmatprep.subr.bf16.mxu0 0
    %594 = vmatpush1.bf16.msra.mxu0 %v553
    %595 = vmatprep.subr.bf16.mxu0 0
    %596 = vmatpush1.bf16.msra.mxu0 %v554
    %597 = vmatprep.subr.bf16.mxu0 0
    %598 = vmatpush1.bf16.msra.mxu0 %v555
    %599 = vmatprep.subr.bf16.mxu0 0
    %600 = vmatpush1.bf16.msra.mxu0 %v556
    %601 = vmatprep.subr.bf16.mxu0 0
    %602 = vmatpush1.bf16.msra.mxu0 %v557
    %603 = vmatprep.subr.bf16.mxu0 0
    %604 = vmatpush1.bf16.msra.mxu0 %v558
    %605 = vmatprep.subr.bf16.mxu0 0
    %606 = vmatpush1.bf16.msra.mxu0 %v559
    %607 = vmatprep.subr.bf16.mxu0 0
    %608 = vmatpush1.bf16.msra.mxu0 %v560
    %609 = vmatprep.mubr.bf16.mxu0 %v480
    %610 = vmatmul.mubr.bf16.gmra.mrb[0].mxu0 %v479
    %v611 = vpop.f32.mrb[0].mxu0
    %v612 = vadd.f32 %v112, %v611
    %v613 = vpop.f32.mrb[0].mxu0
    %v614 = vpop.f32.mrb[0].mxu0
    %v615 = vadd.f32 %v112, %v614
    %v616 = vpop.f32.mrb[0].mxu0
    %617 = vdwg.mxu0
    %618 = vst [vmem:[%s3] sm:$0xff] %v612
    %619 = vst [vmem:[%s3 + $0x8] sm:$0xff] %v615
    // Predicated region
    $region18: #{dqn_forward_packed.1} parent=1 // pred_check
      _
    $region19: #{dqn_forward_packed.1} parent=1 // pred_check_branch
      %621 = sbr.rel (0) target = $region21
    $region20: #{dqn_forward_packed.1} parent=1 // pred_region
      _
    $region21: #{dqn_forward_packed.1} parent=1 // pred_fallthru
      _
    // Predicated region
    $region22: #{dqn_forward_packed.1} parent=1 // pred_check
      _
    $region23: #{dqn_forward_packed.1} parent=1 // pred_check_branch
      %623 = sbr.rel (0) target = $region25
    $region24: #{dqn_forward_packed.1} parent=1 // pred_region
      _
    $region25: #{dqn_forward_packed.1} parent=1 // pred_fallthru
      _
    %624 = vsyncpa [#allocation3], 1

</llo_original>
